<compile_context>
chip_gen: v6e
topology: v6e:2x2x1
jax: 0.10.0
libtpu: 0.0.40
codegen_flags: <defaults>
</compile_context>

<pallas_src>
import numpy as np

import jax
import jax.numpy as jnp
from jax.experimental import pallas as pl
from jax.experimental.pallas import tpu as pltpu


LANE = 128  # vreg lane width (fast axis)


def _sublane(dtype):
    """Rows per vreg sublane group for a given dtype (packing-aware)."""
    itemsize = jnp.dtype(dtype).itemsize
    return max(8, 32 // max(itemsize, 1))  # 8 for f32/i32, 16 for bf16, 32 for i8


# --------------------------------- kernel ----------------------------------


def _h_swish_kernel(x_ref, o_ref):
    x = x_ref[...]
    # h_sigmoid(x) = relu6(x + 3) / 6 ; h_swish(x) = x * h_sigmoid(x)
    o_ref[...] = x * (jnp.clip(x + 3.0, 0.0, 6.0) * (1.0 / 6.0))


# -------------------------------- wrapper -----------------------------------


def h_swish(x, *, block_rows=2048):
    """Elementwise h_swish via a lane-dense (rows, 128) Pallas kernel."""
    orig_shape = x.shape
    orig_dtype = x.dtype
    n = x.size
    sub = _sublane(orig_dtype)

    rows = pl.cdiv(n, LANE)
    if rows <= block_rows:
        # Whole input in one fat grid step.
        rows_pad = ((rows + sub - 1) // sub) * sub
        tile_rows = rows_pad
    else:
        block_rows = ((block_rows + sub - 1) // sub) * sub
        rows_pad = ((rows + block_rows - 1) // block_rows) * block_rows
        tile_rows = block_rows

    n_pad = rows_pad * LANE
    xf = jnp.ravel(x)
    padded = n_pad != n
    if padded:
        xf = jnp.pad(xf, (0, n_pad - n))  # pad values are harmless (elementwise)
    x2d = xf.reshape(rows_pad, LANE)

    grid = (rows_pad // tile_rows,)

    out2d = pl.pallas_call(
        _h_swish_kernel,
        out_shape=jax.ShapeDtypeStruct((rows_pad, LANE), orig_dtype),
        grid_spec=pltpu.PrefetchScalarGridSpec(
            num_scalar_prefetch=0,
            grid=grid,
            in_specs=[pl.BlockSpec((tile_rows, LANE), lambda i: (i, 0))],
            out_specs=pl.BlockSpec((tile_rows, LANE), lambda i: (i, 0)),
        ),
        compiler_params=pltpu.CompilerParams(
            dimension_semantics=("parallel",)),  # lets v7x split across 2 TCs
    )(x2d)

    if padded:
        return out2d.reshape(-1)[:n].reshape(orig_shape)
    return out2d.reshape(orig_shape)


# --------------------------- pure-JAX reference ------------------------------


def reference_h_swish(x):
    return x * jnp.clip(x + 3.0, 0.0, 6.0) / 6.0


# ----------------------------------- main ------------------------------------


if __name__ == "__main__":
    key = jax.random.PRNGKey(0)

    B, C, H, W = 2, 4, 16, 16
    # Scale so values land on both sides of the relu6 clip points (-3 and +3).
    x = 4.0 * jax.random.normal(key, (B, C, H, W), dtype=jnp.float32)

    out = h_swish(x)
    out = jax.block_until_ready(out)

    ref = reference_h_swish(x)
    np.testing.assert_allclose(np.asarray(out), np.asarray(ref),
                               atol=1e-6, rtol=1e-6)
    print("KERNEL_OK")
</pallas_src>

<mosaic_0001>
module attributes {stable_mosaic.version = 11 : i64} {
  func.func @_h_swish_kernel(%arg0: i32, %arg1: memref<16x128xf32, #tpu.memory_space<vmem>>, %arg2: memref<16x128xf32, #tpu.memory_space<vmem>>) attributes {dimension_semantics = [#tpu.dimension_semantics<parallel>], iteration_bounds = array<i64: 1>, scalar_prefetch = 0 : i64, scratch_operands = 0 : i64, tpu.core_type = #tpu.core_type<tc>, window_params = [{transform_indices = @transform_0, window_bounds = array<i64: 16, 128>}, {transform_indices = @transform_1, window_bounds = array<i64: 16, 128>}]} {
    %c0 = arith.constant 0 : index
    %c0_0 = arith.constant 0 : index
    %0 = vector.load %arg1[%c0, %c0_0] : memref<16x128xf32, #tpu.memory_space<vmem>>, vector<16x128xf32>
    %cst = arith.constant 3.000000e+00 : f32
    %1 = vector.broadcast %cst : f32 to vector<16x128xf32>
    %2 = arith.addf %0, %1 : vector<16x128xf32>
    %cst_1 = arith.constant 0.000000e+00 : f32
    %cst_2 = arith.constant 6.000000e+00 : f32
    %3 = vector.broadcast %cst_1 : f32 to vector<16x128xf32>
    %4 = arith.maximumf %3, %2 : vector<16x128xf32>
    %5 = vector.broadcast %cst_2 : f32 to vector<16x128xf32>
    %6 = arith.minimumf %5, %4 : vector<16x128xf32>
    %cst_3 = arith.constant 0.166666672 : f32
    %7 = vector.broadcast %cst_3 : f32 to vector<16x128xf32>
    %8 = arith.mulf %6, %7 : vector<16x128xf32>
    %9 = arith.mulf %0, %8 : vector<16x128xf32>
    %c0_4 = arith.constant 0 : index
    %c0_5 = arith.constant 0 : index
    %10 = vector.load %arg2[%c0_4, %c0_5] : memref<16x128xf32, #tpu.memory_space<vmem>>, vector<16x128xf32>
    tpu.vector_store %arg2[%c0_4, %c0_5], %9 {strides = array<i32>} : memref<16x128xf32, #tpu.memory_space<vmem>>, vector<16x128xf32>,
    return
  }
  func.func @transform_0(%arg0: i32) -> (i32, i32) {
    %c0_i32 = arith.constant 0 : i32
    %c0_i32_0 = arith.constant 0 : i32
    return %arg0, %c0_i32 : i32, i32
  }
  func.func @transform_1(%arg0: i32) -> (i32, i32) {
    %c0_i32 = arith.constant 0 : i32
    %c0_i32_0 = arith.constant 0 : i32
    return %arg0, %c0_i32 : i32, i32
  }
}

</mosaic_0001>

<llo_original>
// kernel: tpu_custom_call.1
$region0: #{tpu_custom_call.1}
  #allocation0 [shape = 'u32[]', space=smem, size = 0x4, offset = 0x4, fixed_abs, tag = 'smem constant byte address 0x4 - core index']
  #allocation1 [shape = 'u32[144,128]{1,0:T(1,128)}', space=vmem, size = 0x12000, scoped, tag = 'internal scratch']
  %s0 = inlined_call_operand.hbm [shape: f32[16,128], index: 0, kind: input, shape index: {}]
  %s1 = inlined_call_operand.hbm [shape: f32[16,128], index: 1, kind: output, shape index: {}]
  %s2 = sld [smem:[#allocation0]]
  $region18: #{tpu_custom_call.1} parent=0
    _
  %s4 = ssub.s32 1, %s2
  %s5 = scalar_select 0, %s4, %s2
  $region1: #{tpu_custom_call.1} parent=0
    #allocation2 [shape = 'u8[8192]{0}', space=vmem, size = 0x2000, scoped, tag = 'input window, operand 0, single buffered']
    #allocation3 [shape = 's32[1]{0}', space=sflag, size = 0x4, scoped, tag = 'scoped memory for tpu_custom_call.1']
    #allocation4 [shape = 's32[1]{0}', space=sflag, size = 0x4, scoped, tag = 'scoped memory for tpu_custom_call.1']
    #allocation5 [shape = 'u8[8192]{0}', space=vmem, size = 0x2000, scoped, tag = 'output window, operand 0, single buffered']
    %6 = vsyncpa [#allocation3], 0
    %7 = vsyncpa [#allocation4], 0
    // Predicated region
    $region2: #{tpu_custom_call.1} parent=1 // pred_check
      _
    $region3: #{tpu_custom_call.1} parent=1 // pred_check_branch
      %9 = sbr.rel (0) target = $region5
    $region4: #{tpu_custom_call.1} parent=1 // pred_region
      %s11 = ssub.s32 256, 256
      %12 = vsyncadd [#allocation3], %s11
      %s13 = sshll.u32 [#allocation2], 4
      %s14 = int_to_ptr.vmem [resolvable:$true] %s13
      %19 = dma.hbm_to_vmem [thread:$0]  %s0, 256, %s14, [#allocation3], 128, 128, 8
    $region5: #{tpu_custom_call.1} parent=1 // pred_fallthru
      _
    // Predicated region
    $region6: #{tpu_custom_call.1} parent=1 // pred_check
      _
    $region7: #{tpu_custom_call.1} parent=1 // pred_check_branch
      %21 = sbr.rel (0) target = $region9
    $region8: #{tpu_custom_call.1} parent=1 // pred_region
      %22 = dma.done [#allocation3], 256
    $region9: #{tpu_custom_call.1} parent=1 // pred_fallthru
      _
    %v23 = vld [vmem:[#allocation2] sm:$0xff]
    %v24 = vld [vmem:[#allocation2 + $0x8] sm:$0xff]
    %v25 = vadd.f32 %v23, 3.0
    %v26 = vadd.f32 %v24, 3.0
    %v27 = vmax.f32 %v25, 0.0
    %v28 = vmax.f32 %v26, 0.0
    %v29 = vmin.f32 %v27, 6.0
    %v30 = vmin.f32 %v28, 6.0
    %v31 = vmul.f32 %v29, 0.16666667
    %v32 = vmul.f32 %v30, 0.16666667
    %v33 = vmul.f32 %v23, %v31
    %v34 = vmul.f32 %v24, %v32
    %35 = vst [vmem:[#allocation5] sm:$0xff] %v33
    %36 = vst [vmem:[#allocation5 + $0x8] sm:$0xff] %v34
    // Predicated region
    $region10: #{tpu_custom_call.1} parent=1 // pred_check
      _
    $region11: #{tpu_custom_call.1} parent=1 // pred_check_branch
      %38 = sbr.rel (0) target = $region13
    $region12: #{tpu_custom_call.1} parent=1 // pred_region
      %s40 = ssub.s32 256, 256
      %41 = vsyncadd [#allocation4], %s40
      %s42 = sshll.u32 [#allocation5], 4
      %s43 = int_to_ptr.vmem [resolvable:$true] %s42
      %48 = dma.vmem_to_hbm [thread:$0]  %s43, 256, %s1, [#allocation4], 128, 128, 8
    $region13: #{tpu_custom_call.1} parent=1 // pred_fallthru
      _
    // Predicated region
    $region14: #{tpu_custom_call.1} parent=1 // pred_check
      _
    $region15: #{tpu_custom_call.1} parent=1 // pred_check_branch
      %50 = sbr.rel (0) target = $region17
    $region16: #{tpu_custom_call.1} parent=1 // pred_region
      %51 = dma.done [#allocation4], 256
    $region17: #{tpu_custom_call.1} parent=1 // pred_fallthru
      _
    %52 = vsyncpa [#allocation3], 1
    %53 = vsyncpa [#allocation4], 1

</llo_original>
